<compile_context>
chip_gen: v7x
topology: tpu7x:2x2x1
jax: 0.10.0
libtpu: 0.0.40
codegen_flags: <defaults>
</compile_context>

<pallas_src>
import functools
import numpy as np

import jax
import jax.numpy as jnp
from jax import lax
from jax.experimental import pallas as pl
from jax.experimental.pallas import tpu as pltpu


# --------------------------------------------------------------------------
# Fused kernel: weighted CE ('labels') + cardinality + boundary BCE, one step.
# --------------------------------------------------------------------------
def _criterion_kernel(logits_ref, tgt_ref, sizes_ref,
                      left_ref, right_ref, mask_ref, gl_ref, gr_ref,
                      ce_ref, card_ref, bnd_ref,
                      *, nil_w, inv_bq, inv_b, inv_spans, q_per_batch):
    # ---------------- weighted cross entropy (celoss) ----------------
    logits = logits_ref[...].astype(jnp.float32)          # [C, BQ]  lane-dense
    C, BQ = logits.shape
    tgt = tgt_ref[...]                                    # [1, BQ] int32

    m = jnp.max(logits, axis=0, keepdims=True)            # [1, BQ]
    lse = jnp.log(jnp.sum(jnp.exp(logits - m), axis=0, keepdims=True)) + m
    cls = lax.broadcasted_iota(jnp.int32, (C, BQ), 0)     # class index per sublane row
    onehot = (cls == tgt).astype(jnp.float32)
    tgt_logit = jnp.sum(onehot * logits, axis=0, keepdims=True)       # [1, BQ]
    w = jnp.where(tgt == 0, nil_w, 1.0).astype(jnp.float32)           # weight gather avoided
    # torch: cross_entropy(..., weight, reduction='none').mean()  ->  mean over B*Q
    ce_ref[...] = jnp.sum(w * (lse - tgt_logit), axis=1, keepdims=True) * inv_bq

    # ---------------- cardinality error ----------------
    # first index achieving the max (matches torch/jnp argmax tie rule)
    first_max = jnp.min(jnp.where(logits >= m, cls, C), axis=0, keepdims=True)  # [1, BQ]
    not_last = (first_max != C - 1).astype(jnp.float32)                         # [1, BQ]
    B = sizes_ref.shape[0]
    col = lax.broadcasted_iota(jnp.int32, (B, BQ), 1)
    row = lax.broadcasted_iota(jnp.int32, (B, BQ), 0)
    lo = row * q_per_batch
    sel = jnp.logical_and(col >= lo, col < lo + q_per_batch).astype(jnp.float32)
    counts = jnp.sum(sel * not_last, axis=1, keepdims=True)                     # [B, 1]
    sizes = sizes_ref[...].astype(jnp.float32)                                  # [B, 1]
    card_ref[...] = jnp.sum(jnp.abs(counts - sizes), axis=0, keepdims=True) * inv_b

    # ---------------- boundary BCE over N gathered spans ----------------
    left = left_ref[...].astype(jnp.float32)              # [N, T] probabilities
    right = right_ref[...].astype(jnp.float32)            # [N, T]
    mask = mask_ref[...].astype(jnp.float32)               # [N, T]
    N, T = mask.shape
    tok = lax.broadcasted_iota(jnp.int32, (N, T), 1)

    def masked_bce_rows(p, g):
        # one-hot target: sum_t mask_t*BCE_t
        #   = sum_t mask_t*(-log(1-p_t)) + mask_g*(log(1-p_g) - log(p_g))
        # torch.binary_cross_entropy clamps each log term at -100.
        oh = (tok == g).astype(jnp.float32)                               # [N, T]
        log1mp = jnp.maximum(jnp.log(1.0 - p), -100.0)                    # [N, T]
        base = jnp.sum(mask * (-log1mp), axis=1, keepdims=True)           # [N, 1]
        p_t = jnp.sum(oh * p, axis=1, keepdims=True)                      # [N, 1]
        l1_t = jnp.sum(oh * log1mp, axis=1, keepdims=True)                # [N, 1]
        m_t = jnp.sum(oh * mask, axis=1, keepdims=True)                   # [N, 1]
        logp_t = jnp.maximum(jnp.log(p_t), -100.0)
        return base + m_t * (l1_t - logp_t)                               # [N, 1]

    rows = masked_bce_rows(left, gl_ref[...]) + masked_bce_rows(right, gr_ref[...])
    bnd_ref[...] = jnp.sum(rows, axis=0, keepdims=True) * inv_spans


def _criterion_pallas(logits_t, tgt_flat, sizes_arr, left, right, mask_rows, gl, gr,
                      *, nil_w, inv_bq, inv_b, inv_spans, q_per_batch):
    kern = functools.partial(_criterion_kernel, nil_w=nil_w, inv_bq=inv_bq,
                             inv_b=inv_b, inv_spans=inv_spans, q_per_batch=q_per_batch)
    vmem = lambda: pl.BlockSpec(memory_space=pltpu.MemorySpace.VMEM)
    ce, card, bnd = pl.pallas_call(
        kern,
        in_specs=[vmem() for _ in range(8)],
        out_specs=[vmem() for _ in range(3)],
        out_shape=[jax.ShapeDtypeStruct((1, 1), jnp.float32) for _ in range(3)],
    )(logits_t, tgt_flat, sizes_arr, left, right, mask_rows, gl, gr)
    return ce[0, 0], card[0, 0], bnd[0, 0]


# --------------------------------------------------------------------------
# Criterion.forward (type_loss='celoss', losses=['labels','cardinality','boundary'])
# --------------------------------------------------------------------------
def criterion_forward(outputs, targets, indices, *, nil_weight=0.5,
                      losses=("labels", "cardinality", "boundary")):
    # TODO(synk): Hungarian matcher (scipy linear_sum_assignment) has no Pallas
    # equivalent; `indices` must be supplied (the original forward allows this).
    # TODO(synk): type_loss='bceloss' branch of loss_labels not implemented (celoss only).
    pred_logits = outputs["pred_logits"]                   # [B, Q, C]
    pred_left = outputs["pred_left"]                       # [B, Q, T]
    pred_right = outputs["pred_right"]                     # [B, Q, T]
    token_mask = outputs["token_mask"]                     # [B, T]
    B, Q, C = pred_logits.shape
    T = pred_left.shape[-1]

    sizes = list(targets["sizes"])                         # python ints per batch
    num_spans = float(sum(sizes))

    batch_idx, src_idx, tgt_idx = indices                  # flat int arrays [N]
    batch_idx = jnp.asarray(batch_idx, jnp.int32)
    src_idx = jnp.asarray(src_idx, jnp.int32)
    tgt_idx = jnp.asarray(tgt_idx, jnp.int32)
    N = int(batch_idx.shape[0])
    offsets = jnp.asarray(np.cumsum([0] + sizes[:-1]), dtype=jnp.int32)
    flat_tgt = offsets[batch_idx] + tgt_idx

    # ---- wrapper-side scatter/gather (tiny; keeps the kernel one dense step) ----
    target_classes_o = targets["labels"][flat_tgt].astype(jnp.int32)
    target_classes = jnp.zeros((B, Q), jnp.int32).at[batch_idx, src_idx].set(target_classes_o)

    if nil_weight == -1:
        nil_w = num_spans / (B * Q - num_spans)
    else:
        nil_w = float(nil_weight)

    # lane-dense layouts for the kernel
    logits_t = pred_logits.reshape(B * Q, C).T             # [C, B*Q]
    tgt_flat = target_classes.reshape(1, B * Q)            # [1, B*Q]
    sizes_arr = jnp.asarray(sizes, jnp.float32).reshape(B, 1)

    if N > 0:
        left = pred_left[batch_idx, src_idx]                               # [N, T]
        right = pred_right[batch_idx, src_idx]                             # [N, T]
        mask_rows = token_mask[batch_idx].astype(jnp.float32)              # [N, T]
        gl = targets["gt_left"][flat_tgt].astype(jnp.int32).reshape(N, 1)  # [N, 1]
        gr = targets["gt_right"][flat_tgt].astype(jnp.int32).reshape(N, 1)
        inv_spans = 1.0 / max(num_spans, 1.0)
    else:
        # zero-mask dummy row -> boundary loss is exactly 0 (no div-by-zero).
        left = jnp.full((1, T), 0.5, pred_left.dtype)
        right = jnp.full((1, T), 0.5, pred_right.dtype)
        mask_rows = jnp.zeros((1, T), jnp.float32)
        gl = jnp.zeros((1, 1), jnp.int32)
        gr = jnp.zeros((1, 1), jnp.int32)
        inv_spans = 0.0

    loss_ce, card_err, loss_b = _criterion_pallas(
        logits_t, tgt_flat, sizes_arr, left, right, mask_rows, gl, gr,
        nil_w=nil_w, inv_bq=1.0 / float(B * Q), inv_b=1.0 / float(B),
        inv_spans=inv_spans, q_per_batch=Q)

    out = {}
    if "labels" in losses:
        out["loss_ce"] = loss_ce
    if "cardinality" in losses:
        out["cardinality_error"] = card_err
    if "boundary" in losses:
        out["loss_boundary"] = loss_b
    return out, indices


# --------------------------------------------------------------------------
# Pure-JAX reference (numerical sanity check only)
# --------------------------------------------------------------------------
def _reference(outputs, targets, indices, nil_weight):
    pred_logits = outputs["pred_logits"]
    B, Q, C = pred_logits.shape
    sizes = list(targets["sizes"])
    num_spans = float(sum(sizes))
    batch_idx, src_idx, tgt_idx = indices
    offsets = jnp.asarray(np.cumsum([0] + sizes[:-1]), dtype=jnp.int32)
    flat_tgt = offsets[batch_idx] + tgt_idx

    tc = jnp.zeros((B, Q), jnp.int32).at[batch_idx, src_idx].set(targets["labels"][flat_tgt])
    w = jnp.ones((C,), jnp.float32).at[0].set(nil_weight)
    logp = jax.nn.log_softmax(pred_logits.reshape(B * Q, C), axis=-1)
    nll = -jnp.take_along_axis(logp, tc.reshape(-1, 1), axis=-1)[:, 0]
    loss_ce = jnp.mean(w[tc.reshape(-1)] * nll)

    card_pred = jnp.sum(jnp.argmax(pred_logits, -1) != C - 1, axis=1).astype(jnp.float32)
    card_err = jnp.mean(jnp.abs(card_pred - jnp.asarray(sizes, jnp.float32)))

    sl = outputs["pred_left"][batch_idx, src_idx]
    sr = outputs["pred_right"][batch_idx, src_idx]
    tm = outputs["token_mask"][batch_idx].astype(jnp.float32)
    T = sl.shape[-1]
    loh = jax.nn.one_hot(targets["gt_left"][flat_tgt], T)
    roh = jax.nn.one_hot(targets["gt_right"][flat_tgt], T)
    bce = lambda p, y: -(y * jnp.log(p) + (1 - y) * jnp.log(1 - p))
    loss_b = jnp.sum((bce(sl, loh) + bce(sr, roh)) * tm) / num_spans
    return loss_ce, card_err, loss_b


if __name__ == "__main__":
    key = jax.random.PRNGKey(0)
    B, Q, C, T = 2, 8, 5, 16          # batch, queries, entity types, tokens
    k1, k2, k3, k4, k5, k6 = jax.random.split(key, 6)

    outputs = {
        "pred_logits": jax.random.normal(k1, (B, Q, C), jnp.float32),
        "pred_left":   jax.nn.sigmoid(jax.random.normal(k2, (B, Q, T), jnp.float32)),
        "pred_right":  jax.nn.sigmoid(jax.random.normal(k3, (B, Q, T), jnp.float32)),
        "token_mask":  (jnp.arange(T)[None, :] < jnp.array([[12], [10]])).astype(jnp.float32),
    }

    sizes = [3, 2]                     # gt spans per batch element
    targets = {
        "sizes": sizes,
        "labels":   jax.random.randint(k4, (sum(sizes),), 1, C, dtype=jnp.int32),
        "gt_left":  jax.random.randint(k5, (sum(sizes),), 0, T, dtype=jnp.int32),
        "gt_right": jax.random.randint(k6, (sum(sizes),), 0, T, dtype=jnp.int32),
    }

    # matcher output (supplied externally; Hungarian matching is not a kernel op)
    batch_idx = jnp.array([0, 0, 0, 1, 1], jnp.int32)
    src_idx = jnp.array([1, 4, 6, 0, 3], jnp.int32)
    tgt_idx = jnp.array([0, 1, 2, 1, 0], jnp.int32)
    indices = (batch_idx, src_idx, tgt_idx)

    nil_weight = 0.5
    losses, _ = criterion_forward(outputs, targets, indices, nil_weight=nil_weight)
    losses = jax.tree_util.tree_map(jax.block_until_ready, losses)

    ref_ce, ref_card, ref_b = _reference(outputs, targets, indices, nil_weight)
    np.testing.assert_allclose(np.asarray(losses["loss_ce"]), np.asarray(ref_ce),
                               rtol=1e-4, atol=1e-4)
    np.testing.assert_allclose(np.asarray(losses["cardinality_error"]), np.asarray(ref_card),
                               rtol=1e-4, atol=1e-4)
    np.testing.assert_allclose(np.asarray(losses["loss_boundary"]), np.asarray(ref_b),
                               rtol=1e-4, atol=1e-4)

    print("KERNEL_OK")
</pallas_src>

<mosaic_0001>
module attributes {stable_mosaic.version = 11 : i64} {
  func.func @_criterion_kernel(%arg0: memref<5x16xf32, #tpu.memory_space<vmem>>, %arg1: memref<1x16xi32, #tpu.memory_space<vmem>>, %arg2: memref<2x1xf32, #tpu.memory_space<vmem>>, %arg3: memref<5x16xf32, #tpu.memory_space<vmem>>, %arg4: memref<5x16xf32, #tpu.memory_space<vmem>>, %arg5: memref<5x16xf32, #tpu.memory_space<vmem>>, %arg6: memref<5x1xi32, #tpu.memory_space<vmem>>, %arg7: memref<5x1xi32, #tpu.memory_space<vmem>>, %arg8: memref<1x1xf32, #tpu.memory_space<vmem>>, %arg9: memref<1x1xf32, #tpu.memory_space<vmem>>, %arg10: memref<1x1xf32, #tpu.memory_space<vmem>>) attributes {dimension_semantics = [], scalar_prefetch = 0 : i64, scratch_operands = 0 : i64, tpu.core_type = #tpu.core_type<tc>} {
    %c0 = arith.constant 0 : index
    %c0_0 = arith.constant 0 : index
    %0 = vector.load %arg0[%c0, %c0_0] : memref<5x16xf32, #tpu.memory_space<vmem>>, vector<5x16xf32>
    %c0_1 = arith.constant 0 : index
    %c0_2 = arith.constant 0 : index
    %1 = vector.load %arg1[%c0_1, %c0_2] : memref<1x16xi32, #tpu.memory_space<vmem>>, vector<1x16xi32>
    %cst = arith.constant dense<0xFF800000> : vector<16xf32>
    %2 = vector.multi_reduction <maximumf>, %0, %cst [0] : vector<5x16xf32> to vector<16xf32>
    %3 = vector.shape_cast %2 : vector<16xf32> to vector<1x16xf32>
    %4 = vector.broadcast %3 : vector<1x16xf32> to vector<5x16xf32>
    %5 = arith.subf %0, %4 : vector<5x16xf32>
    %6 = math.exp %5 : vector<5x16xf32>
    %cst_3 = arith.constant dense<0.000000e+00> : vector<16xf32>
    %7 = vector.multi_reduction <add>, %6, %cst_3 [0] : vector<5x16xf32> to vector<16xf32>
    %8 = vector.shape_cast %7 : vector<16xf32> to vector<1x16xf32>
    %9 = math.log %8 : vector<1x16xf32>
    %10 = arith.addf %9, %3 : vector<1x16xf32>
    %11 = tpu.iota {dimensions = array<i32: 0>} : vector<5x16xi32>
    %12 = vector.broadcast %1 : vector<1x16xi32> to vector<5x16xi32>
    %13 = arith.cmpi eq, %11, %12 : vector<5x16xi32>
    %14 = arith.extui %13 : vector<5x16xi1> to vector<5x16xi32>
    %15 = arith.sitofp %14 : vector<5x16xi32> to vector<5x16xf32>
    %16 = arith.mulf %15, %0 : vector<5x16xf32>
    %cst_4 = arith.constant dense<0.000000e+00> : vector<16xf32>
    %17 = vector.multi_reduction <add>, %16, %cst_4 [0] : vector<5x16xf32> to vector<16xf32>
    %18 = vector.shape_cast %17 : vector<16xf32> to vector<1x16xf32>
    %c0_i32 = arith.constant 0 : i32
    %19 = vector.broadcast %c0_i32 : i32 to vector<1x16xi32>
    %20 = arith.cmpi eq, %1, %19 : vector<1x16xi32>
    %cst_5 = arith.constant 5.000000e-01 : f32
    %cst_6 = arith.constant 1.000000e+00 : f32
    %21 = vector.broadcast %cst_5 : f32 to vector<1x16xf32>
    %22 = vector.broadcast %cst_6 : f32 to vector<1x16xf32>
    %23 = arith.select %20, %21, %22 : vector<1x16xi1>, vector<1x16xf32>
    %24 = arith.subf %10, %18 : vector<1x16xf32>
    %25 = arith.mulf %23, %24 : vector<1x16xf32>
    %cst_7 = arith.constant dense<0.000000e+00> : vector<1xf32>
    %26 = vector.multi_reduction <add>, %25, %cst_7 [1] : vector<1x16xf32> to vector<1xf32>
    %27 = vector.shape_cast %26 : vector<1xf32> to vector<1x1xf32>
    %cst_8 = arith.constant 6.250000e-02 : f32
    %28 = vector.broadcast %cst_8 : f32 to vector<1x1xf32>
    %29 = arith.mulf %27, %28 : vector<1x1xf32>
    %c0_9 = arith.constant 0 : index
    %c0_10 = arith.constant 0 : index
    %30 = vector.load %arg8[%c0_9, %c0_10] : memref<1x1xf32, #tpu.memory_space<vmem>>, vector<1x1xf32>
    tpu.vector_store %arg8[%c0_9, %c0_10], %29 {strides = array<i32>} : memref<1x1xf32, #tpu.memory_space<vmem>>, vector<1x1xf32>,
    %31 = vector.broadcast %3 : vector<1x16xf32> to vector<5x16xf32>
    %32 = arith.cmpf oge, %0, %31 : vector<5x16xf32>
    %c5_i32 = arith.constant 5 : i32
    %33 = vector.broadcast %c5_i32 : i32 to vector<5x16xi32>
    %34 = arith.select %32, %11, %33 : vector<5x16xi1>, vector<5x16xi32>
    %cst_11 = arith.constant dense<2147483647> : vector<16xi32>
    %35 = vector.multi_reduction <minsi>, %34, %cst_11 [0] : vector<5x16xi32> to vector<16xi32>
    %36 = vector.shape_cast %35 : vector<16xi32> to vector<1x16xi32>
    %c4_i32 = arith.constant 4 : i32
    %37 = vector.broadcast %c4_i32 : i32 to vector<1x16xi32>
    %38 = arith.cmpi ne, %36, %37 : vector<1x16xi32>
    %39 = arith.extui %38 : vector<1x16xi1> to vector<1x16xi32>
    %40 = arith.sitofp %39 : vector<1x16xi32> to vector<1x16xf32>
    %41 = tpu.iota {dimensions = array<i32: 1>} : vector<2x16xi32>
    %42 = tpu.iota {dimensions = array<i32: 0>} : vector<2x16xi32>
    %c8_i32 = arith.constant 8 : i32
    %43 = vector.broadcast %c8_i32 : i32 to vector<2x16xi32>
    %44 = arith.muli %42, %43 : vector<2x16xi32>
    %45 = arith.cmpi sge, %41, %44 : vector<2x16xi32>
    %c8_i32_12 = arith.constant 8 : i32
    %46 = vector.broadcast %c8_i32_12 : i32 to vector<2x16xi32>
    %47 = arith.addi %44, %46 : vector<2x16xi32>
    %48 = arith.cmpi slt, %41, %47 : vector<2x16xi32>
    %49 = arith.andi %45, %48 : vector<2x16xi1>
    %50 = arith.extui %49 : vector<2x16xi1> to vector<2x16xi32>
    %51 = arith.sitofp %50 : vector<2x16xi32> to vector<2x16xf32>
    %52 = vector.broadcast %40 : vector<1x16xf32> to vector<2x16xf32>
    %53 = arith.mulf %51, %52 : vector<2x16xf32>
    %cst_13 = arith.constant dense<0.000000e+00> : vector<2xf32>
    %54 = vector.multi_reduction <add>, %53, %cst_13 [1] : vector<2x16xf32> to vector<2xf32>
    %55 = vector.shape_cast %54 : vector<2xf32> to vector<2x1xf32>
    %c0_14 = arith.constant 0 : index
    %c0_15 = arith.constant 0 : index
    %56 = vector.load %arg2[%c0_14, %c0_15] : memref<2x1xf32, #tpu.memory_space<vmem>>, vector<2x1xf32>
    %57 = arith.subf %55, %56 : vector<2x1xf32>
    %58 = math.absf %57 : vector<2x1xf32>
    %cst_16 = arith.constant dense<0.000000e+00> : vector<1xf32>
    %59 = vector.multi_reduction <add>, %58, %cst_16 [0] : vector<2x1xf32> to vector<1xf32>
    %60 = vector.shape_cast %59 : vector<1xf32> to vector<1x1xf32>
    %cst_17 = arith.constant 5.000000e-01 : f32
    %61 = vector.broadcast %cst_17 : f32 to vector<1x1xf32>
    %62 = arith.mulf %60, %61 : vector<1x1xf32>
    %c0_18 = arith.constant 0 : index
    %c0_19 = arith.constant 0 : index
    %63 = vector.load %arg9[%c0_18, %c0_19] : memref<1x1xf32, #tpu.memory_space<vmem>>, vector<1x1xf32>
    tpu.vector_store %arg9[%c0_18, %c0_19], %62 {strides = array<i32>} : memref<1x1xf32, #tpu.memory_space<vmem>>, vector<1x1xf32>,
    %c0_20 = arith.constant 0 : index
    %c0_21 = arith.constant 0 : index
    %64 = vector.load %arg3[%c0_20, %c0_21] : memref<5x16xf32, #tpu.memory_space<vmem>>, vector<5x16xf32>
    %c0_22 = arith.constant 0 : index
    %c0_23 = arith.constant 0 : index
    %65 = vector.load %arg4[%c0_22, %c0_23] : memref<5x16xf32, #tpu.memory_space<vmem>>, vector<5x16xf32>
    %c0_24 = arith.constant 0 : index
    %c0_25 = arith.constant 0 : index
    %66 = vector.load %arg5[%c0_24, %c0_25] : memref<5x16xf32, #tpu.memory_space<vmem>>, vector<5x16xf32>
    %67 = tpu.iota {dimensions = array<i32: 1>} : vector<5x16xi32>
    %c0_26 = arith.constant 0 : index
    %c0_27 = arith.constant 0 : index
    %68 = vector.load %arg6[%c0_26, %c0_27] : memref<5x1xi32, #tpu.memory_space<vmem>>, vector<5x1xi32>
    %69 = vector.broadcast %68 : vector<5x1xi32> to vector<5x16xi32>
    %70 = arith.cmpi eq, %67, %69 : vector<5x16xi32>
    %71 = arith.extui %70 : vector<5x16xi1> to vector<5x16xi32>
    %72 = arith.sitofp %71 : vector<5x16xi32> to vector<5x16xf32>
    %cst_28 = arith.constant 1.000000e+00 : f32
    %73 = vector.broadcast %cst_28 : f32 to vector<5x16xf32>
    %74 = arith.subf %73, %64 : vector<5x16xf32>
    %75 = math.log %74 : vector<5x16xf32>
    %cst_29 = arith.constant -1.000000e+02 : f32
    %76 = vector.broadcast %cst_29 : f32 to vector<5x16xf32>
    %77 = arith.maximumf %75, %76 : vector<5x16xf32>
    %cst_30 = arith.constant 0.000000e+00 : f32
    %78 = vector.broadcast %cst_30 : f32 to vector<5x16xf32>
    %79 = arith.subf %78, %77 : vector<5x16xf32>
    %80 = arith.mulf %66, %79 : vector<5x16xf32>
    %cst_31 = arith.constant dense<0.000000e+00> : vector<5xf32>
    %81 = vector.multi_reduction <add>, %80, %cst_31 [1] : vector<5x16xf32> to vector<5xf32>
    %82 = vector.shape_cast %81 : vector<5xf32> to vector<5x1xf32>
    %83 = arith.mulf %72, %64 : vector<5x16xf32>
    %cst_32 = arith.constant dense<0.000000e+00> : vector<5xf32>
    %84 = vector.multi_reduction <add>, %83, %cst_32 [1] : vector<5x16xf32> to vector<5xf32>
    %85 = vector.shape_cast %84 : vector<5xf32> to vector<5x1xf32>
    %86 = arith.mulf %72, %77 : vector<5x16xf32>
    %cst_33 = arith.constant dense<0.000000e+00> : vector<5xf32>
    %87 = vector.multi_reduction <add>, %86, %cst_33 [1] : vector<5x16xf32> to vector<5xf32>
    %88 = vector.shape_cast %87 : vector<5xf32> to vector<5x1xf32>
    %89 = arith.mulf %72, %66 : vector<5x16xf32>
    %cst_34 = arith.constant dense<0.000000e+00> : vector<5xf32>
    %90 = vector.multi_reduction <add>, %89, %cst_34 [1] : vector<5x16xf32> to vector<5xf32>
    %91 = vector.shape_cast %90 : vector<5xf32> to vector<5x1xf32>
    %92 = math.log %85 : vector<5x1xf32>
    %cst_35 = arith.constant -1.000000e+02 : f32
    %93 = vector.broadcast %cst_35 : f32 to vector<5x1xf32>
    %94 = arith.maximumf %92, %93 : vector<5x1xf32>
    %95 = arith.subf %88, %94 : vector<5x1xf32>
    %96 = arith.mulf %91, %95 : vector<5x1xf32>
    %97 = arith.addf %82, %96 : vector<5x1xf32>
    %c0_36 = arith.constant 0 : index
    %c0_37 = arith.constant 0 : index
    %98 = vector.load %arg7[%c0_36, %c0_37] : memref<5x1xi32, #tpu.memory_space<vmem>>, vector<5x1xi32>
    %99 = vector.broadcast %98 : vector<5x1xi32> to vector<5x16xi32>
    %100 = arith.cmpi eq, %67, %99 : vector<5x16xi32>
    %101 = arith.extui %100 : vector<5x16xi1> to vector<5x16xi32>
    %102 = arith.sitofp %101 : vector<5x16xi32> to vector<5x16xf32>
    %cst_38 = arith.constant 1.000000e+00 : f32
    %103 = vector.broadcast %cst_38 : f32 to vector<5x16xf32>
    %104 = arith.subf %103, %65 : vector<5x16xf32>
    %105 = math.log %104 : vector<5x16xf32>
    %cst_39 = arith.constant -1.000000e+02 : f32
    %106 = vector.broadcast %cst_39 : f32 to vector<5x16xf32>
    %107 = arith.maximumf %105, %106 : vector<5x16xf32>
    %cst_40 = arith.constant 0.000000e+00 : f32
    %108 = vector.broadcast %cst_40 : f32 to vector<5x16xf32>
    %109 = arith.subf %108, %107 : vector<5x16xf32>
    %110 = arith.mulf %66, %109 : vector<5x16xf32>
    %cst_41 = arith.constant dense<0.000000e+00> : vector<5xf32>
    %111 = vector.multi_reduction <add>, %110, %cst_41 [1] : vector<5x16xf32> to vector<5xf32>
    %112 = vector.shape_cast %111 : vector<5xf32> to vector<5x1xf32>
    %113 = arith.mulf %102, %65 : vector<5x16xf32>
    %cst_42 = arith.constant dense<0.000000e+00> : vector<5xf32>
    %114 = vector.multi_reduction <add>, %113, %cst_42 [1] : vector<5x16xf32> to vector<5xf32>
    %115 = vector.shape_cast %114 : vector<5xf32> to vector<5x1xf32>
    %116 = arith.mulf %102, %107 : vector<5x16xf32>
    %cst_43 = arith.constant dense<0.000000e+00> : vector<5xf32>
    %117 = vector.multi_reduction <add>, %116, %cst_43 [1] : vector<5x16xf32> to vector<5xf32>
    %118 = vector.shape_cast %117 : vector<5xf32> to vector<5x1xf32>
    %119 = arith.mulf %102, %66 : vector<5x16xf32>
    %cst_44 = arith.constant dense<0.000000e+00> : vector<5xf32>
    %120 = vector.multi_reduction <add>, %119, %cst_44 [1] : vector<5x16xf32> to vector<5xf32>
    %121 = vector.shape_cast %120 : vector<5xf32> to vector<5x1xf32>
    %122 = math.log %115 : vector<5x1xf32>
    %cst_45 = arith.constant -1.000000e+02 : f32
    %123 = vector.broadcast %cst_45 : f32 to vector<5x1xf32>
    %124 = arith.maximumf %122, %123 : vector<5x1xf32>
    %125 = arith.subf %118, %124 : vector<5x1xf32>
    %126 = arith.mulf %121, %125 : vector<5x1xf32>
    %127 = arith.addf %112, %126 : vector<5x1xf32>
    %128 = arith.addf %97, %127 : vector<5x1xf32>
    %cst_46 = arith.constant dense<0.000000e+00> : vector<1xf32>
    %129 = vector.multi_reduction <add>, %128, %cst_46 [0] : vector<5x1xf32> to vector<1xf32>
    %130 = vector.shape_cast %129 : vector<1xf32> to vector<1x1xf32>
    %cst_47 = arith.constant 2.000000e-01 : f32
    %131 = vector.broadcast %cst_47 : f32 to vector<1x1xf32>
    %132 = arith.mulf %130, %131 : vector<1x1xf32>
    %c0_48 = arith.constant 0 : index
    %c0_49 = arith.constant 0 : index
    %133 = vector.load %arg10[%c0_48, %c0_49] : memref<1x1xf32, #tpu.memory_space<vmem>>, vector<1x1xf32>
    tpu.vector_store %arg10[%c0_48, %c0_49], %132 {strides = array<i32>} : memref<1x1xf32, #tpu.memory_space<vmem>>, vector<1x1xf32>,
    return
  }
}

</mosaic_0001>

<llo_original>
// kernel: tpu_custom_call.1
$region0: #{tpu_custom_call.1}
  #allocation0 [shape = 'u32[]', space=smem, size = 0x4, offset = 0x4, fixed_abs, tag = 'smem constant byte address 0x4 - core index']
  #allocation1 [shape = 'u32[144,128]{1,0:T(1,128)}', space=vmem, size = 0x12000, scoped, tag = 'internal scratch']
  %s0 = inlined_call_operand.vmem [shape: f32[5,16], index: 0, kind: input, shape index: {}]
  %s1 = inlined_call_operand.hbm [shape: s32[1,16], index: 1, kind: input, shape index: {}]
  %s2 = inlined_call_operand.vmem [shape: f32[2,1], index: 2, kind: input, shape index: {}]
  %s3 = inlined_call_operand.vmem [shape: f32[5,16], index: 3, kind: input, shape index: {}]
  %s4 = inlined_call_operand.vmem [shape: f32[5,16], index: 4, kind: input, shape index: {}]
  %s5 = inlined_call_operand.vmem [shape: f32[5,16], index: 5, kind: input, shape index: {}]
  %s6 = inlined_call_operand.vmem [shape: s32[5,1], index: 6, kind: input, shape index: {}]
  %s7 = inlined_call_operand.vmem [shape: s32[5,1], index: 7, kind: input, shape index: {}]
  %s8 = inlined_call_operand.hbm [shape: f32[1,1], index: 8, kind: output, shape index: {0}]
  %s9 = inlined_call_operand.hbm [shape: f32[1,1], index: 9, kind: output, shape index: {1}]
  %s10 = inlined_call_operand.hbm [shape: f32[1,1], index: 10, kind: output, shape index: {2}]
  %11 = xla_tuple %s8, %s9, %s10
  %s12 = sld [smem:[#allocation0]]
  $region62: #{tpu_custom_call.1} parent=0
    _
  %s14 = ssub.s32 1, %s12
  %s15 = scalar_select 0, %s14, %s12
  $region1: #{tpu_custom_call.1} parent=0
    #allocation2 [shape = 'u8[512]{0}', space=vmem, size = 0x400, scoped, tag = 'input window, operand 1, single buffered']
    #allocation3 [shape = 's32[1]{0}', space=sflag, size = 0x4, scoped, tag = 'scoped memory for tpu_custom_call.1']
    #allocation4 [shape = 's32[1]{0}', space=sflag, size = 0x4, scoped, tag = 'scoped memory for tpu_custom_call.1']
    #allocation5 [shape = 'u8[512]{0}', space=vmem, size = 0x400, scoped, tag = 'output window, operand 0, single buffered']
    #allocation6 [shape = 'u8[512]{0}', space=vmem, size = 0x400, scoped, tag = 'output window, operand 1, single buffered']
    #allocation7 [shape = 's32[1]{0}', space=sflag, size = 0x4, scoped, tag = 'scoped memory for tpu_custom_call.1']
    #allocation8 [shape = 'u8[512]{0}', space=vmem, size = 0x400, scoped, tag = 'output window, operand 2, single buffered']
    %16 = vsyncpa [#allocation3], 0
    %17 = vsyncpa [#allocation4], 0
    %18 = vsyncpa [#allocation7], 0
    // Predicated region
    $region2: #{tpu_custom_call.1} parent=1 // pred_check
      _
    $region3: #{tpu_custom_call.1} parent=1 // pred_check_branch
      %20 = sbr.rel (0) target = $region5
    $region4: #{tpu_custom_call.1} parent=1 // pred_region
      _
    $region5: #{tpu_custom_call.1} parent=1 // pred_fallthru
      _
    // Predicated region
    $region6: #{tpu_custom_call.1} parent=1 // pred_check
      _
    $region7: #{tpu_custom_call.1} parent=1 // pred_check_branch
      %22 = sbr.rel (0) target = $region9
    $region8: #{tpu_custom_call.1} parent=1 // pred_region
      %s24 = ssub.s32 16, 16
      %25 = vsyncadd [#allocation3], %s24
      %s27 = sshll.u32 [#allocation2], 4
      %s28 = int_to_ptr.vmem [resolvable:$true] %s27
      %30 = dma.hbm_to_vmem [thread:$0]  %s1, 16, %s28, [#allocation3]
    $region9: #{tpu_custom_call.1} parent=1 // pred_fallthru
      _
    // Predicated region
    $region10: #{tpu_custom_call.1} parent=1 // pred_check
      _
    $region11: #{tpu_custom_call.1} parent=1 // pred_check_branch
      %32 = sbr.rel (0) target = $region13
    $region12: #{tpu_custom_call.1} parent=1 // pred_region
      _
    $region13: #{tpu_custom_call.1} parent=1 // pred_fallthru
      _
    // Predicated region
    $region14: #{tpu_custom_call.1} parent=1 // pred_check
      _
    $region15: #{tpu_custom_call.1} parent=1 // pred_check_branch
      %34 = sbr.rel (0) target = $region17
    $region16: #{tpu_custom_call.1} parent=1 // pred_region
      _
    $region17: #{tpu_custom_call.1} parent=1 // pred_fallthru
      _
    // Predicated region
    $region18: #{tpu_custom_call.1} parent=1 // pred_check
      _
    $region19: #{tpu_custom_call.1} parent=1 // pred_check_branch
      %36 = sbr.rel (0) target = $region21
    $region20: #{tpu_custom_call.1} parent=1 // pred_region
      _
    $region21: #{tpu_custom_call.1} parent=1 // pred_fallthru
      _
    // Predicated region
    $region22: #{tpu_custom_call.1} parent=1 // pred_check
      _
    $region23: #{tpu_custom_call.1} parent=1 // pred_check_branch
      %38 = sbr.rel (0) target = $region25
    $region24: #{tpu_custom_call.1} parent=1 // pred_region
      _
    $region25: #{tpu_custom_call.1} parent=1 // pred_fallthru
      _
    // Predicated region
    $region26: #{tpu_custom_call.1} parent=1 // pred_check
      _
    $region27: #{tpu_custom_call.1} parent=1 // pred_check_branch
      %40 = sbr.rel (0) target = $region29
    $region28: #{tpu_custom_call.1} parent=1 // pred_region
      _
    $region29: #{tpu_custom_call.1} parent=1 // pred_fallthru
      _
    // Predicated region
    $region30: #{tpu_custom_call.1} parent=1 // pred_check
      _
    $region31: #{tpu_custom_call.1} parent=1 // pred_check_branch
      %42 = sbr.rel (0) target = $region33
    $region32: #{tpu_custom_call.1} parent=1 // pred_region
      _
    $region33: #{tpu_custom_call.1} parent=1 // pred_fallthru
      _
    // Predicated region
    $region34: #{tpu_custom_call.1} parent=1 // pred_check
      _
    $region35: #{tpu_custom_call.1} parent=1 // pred_check_branch
      %44 = sbr.rel (0) target = $region37
    $region36: #{tpu_custom_call.1} parent=1 // pred_region
      %45 = dma.done [#allocation3], 16
    $region37: #{tpu_custom_call.1} parent=1 // pred_fallthru
      _
    %v46 = vld [vmem:[%s0] sm:$0x1f]
    %v47 = vld [vmem:[#allocation2] sm:$0x1]
    %vm48 = vcmask 126976
    %v49 = vsel %vm48, %v46, -inf
    %v50 = vrot.slane %v49, 4
    %v51 = vmax.f32 %v49, %v50
    %v52 = vrot.slane %v51, 2
    %v53 = vmax.f32 %v51, %v52
    %v54 = vrot.slane %v53, 1
    %v55 = vmax.f32 %v53, %v54
    %v56 = vsub.f32 %v46, %v55
    %v57 = vmul.f32 %v56, 1.442695
    %v58 = vpow.pop %v57
    %v59 = vsel %vm48, %v58, 0.0
    %v60 = vrot.slane %v59, 4
    %v61 = vadd.f32 %v59, %v60
    %v62 = vrot.slane %v61, 2
    %v63 = vadd.f32 %v61, %v62
    %v64 = vrot.slane %v63, 1
    %v65 = vadd.f32 %v63, %v64
    %v66 = vlog2.pop %v65
    %v67 = vmul.f32 %v66, 0.6931472
    %v68 = vadd.f32 %v67, %v55
    %v69 = vlaneseq
    %v70 = vshrl.u32 %v69, 7
    %v71 = vlaneseq
    %v72 = vshrl.u32 %v71, 7
    %v73 = vsub.s32 0, %v72
    %v74 = vrot.slane %v47, %v73
    %vm75 = vcmp.eq.s32.totalorder %v70, %v74
    %v76 = vsel %vm75, 1, 0
    %v77 = vcvt.s32.f32 %v76
    %v78 = vmul.f32 %v77, %v46
    %v79 = vsel %vm48, %v78, 0.0
    %v80 = vrot.slane %v79, 4
    %v81 = vadd.f32 %v79, %v80
    %v82 = vrot.slane %v81, 2
    %v83 = vadd.f32 %v81, %v82
    %v84 = vrot.slane %v83, 1
    %v85 = vadd.f32 %v83, %v84
    %vm86 = vcmp.eq.s32.totalorder %v47, 0
    %v87 = vsel %vm86, 0.5, 1.0
    %v88 = vsub.f32 %v68, %v85
    %v89 = vmul.f32 %v87, %v88
    %vm90 = vcmask 122880
    %v91 = vsel %vm90, %v89, 0.0
    %92 = vadd.xlane.f32.xlu0 %v91
    %v93 = vpop.xlane.xlu0 %92
    %v94 = vmul.f32 %v93, 0.0625
    %vm95 = vcmask 0
    %96 = vst.msk [vmem:[#allocation5] sm:$0x1] %vm95, %v94
    %vm97 = vcmp.ge.f32.partialorder %v46, %v55
    %v98 = vsel %vm97, %v70, 5
    %v99 = vsel %vm48, %v98, 2147483647
    %v100 = vrot.slane %v99, 4
    %vm101 = vcmp.lt.s32.totalorder %v99, %v100
    %v102 = vsel %vm101, %v99, %v100
    %v103 = vrot.slane %v102, 2
    %vm104 = vcmp.lt.s32.totalorder %v102, %v103
    %v105 = vsel %vm104, %v102, %v103
    %v106 = vrot.slane %v105, 1
    %vm107 = vcmp.lt.s32.totalorder %v105, %v106
    %v108 = vsel %vm107, %v105, %v106
    %vm109 = vcmp.ne.s32.totalorder %v108, 4
    %v110 = vsel %vm109, 1, 0
    %v111 = vcvt.s32.f32 %v110
    %v112 = vlaneseq
    %v113 = vand.u32 %v112, 127
    %v114 = vmul.u32 %v70, 8
    %vm115 = vcmp.ge.s32.totalorder %v113, %v114
    %v116 = vadd.s32 %v114, 8
    %vm117 = vcmp.lt.s32.totalorder %v113, %v116
    %vm118 = vmand %vm115, %vm117
    %v119 = vsel %vm118, 1, 0
    %v120 = vcvt.s32.f32 %v119
    %v121 = vmul.f32 %v120, %v111
    %vm122 = vcmask 123904
    %v123 = vsel %vm122, %v121, 0.0
    %124 = vadd.xlane.f32.xlu0 %v123
    %v125 = vpop.xlane.xlu0 %124
    %v126 = vld [vmem:[%s2] sm:$0x3]
    %v127 = vsub.f32 %v125, %v126
    %v128 = vand.u32 2147483647, %v127
    %vm129 = vcmask 1024
    %v130 = vsel %vm129, %v128, 0.0
    %v131 = vrot.slane %v130, 4
    %v132 = vadd.f32 %v130, %v131
    %v133 = vrot.slane %v132, 2
    %v134 = vadd.f32 %v132, %v133
    %v135 = vrot.slane %v134, 1
    %v136 = vadd.f32 %v134, %v135
    %v137 = vmul.f32 %v136, 0.5
    %138 = vst.msk [vmem:[#allocation6] sm:$0x1] %vm95, %v137
    %v139 = vld [vmem:[%s3] sm:$0x1f]
    %v140 = vld [vmem:[%s4] sm:$0x1f]
    %v141 = vld [vmem:[%s5] sm:$0x1f]
    %v142 = vld [vmem:[%s6] sm:$0x1f]
    %143 = vset.pattern.permute.xlu0 0
    %144 = vperm.xlu0 %143, %v142
    %v145 = vpop.permute.xlu0 %144
    %vm146 = vcmp.eq.s32.totalorder %v113, %v145
    %v147 = vsel %vm146, 1, 0
    %v148 = vcvt.s32.f32 %v147
    %v149 = vsub.f32 1.0, %v139
    %v150 = vlog2.pop %v149
    %v151 = vmul.f32 %v150, 0.6931472
    %v152 = vmax.f32 %v151, -100.0
    %v153 = vsub.f32 0.0, %v152
    %v154 = vmul.f32 %v141, %v153
    %v155 = vsel %vm48, %v154, 0.0
    %156 = vadd.xlane.f32.xlu0 %v155
    %v157 = vpop.xlane.xlu0 %156
    %v158 = vmul.f32 %v148, %v139
    %v159 = vsel %vm48, %v158, 0.0
    %160 = vadd.xlane.f32.xlu0 %v159
    %v161 = vpop.xlane.xlu0 %160
    %v162 = vmul.f32 %v148, %v152
    %v163 = vsel %vm48, %v162, 0.0
    %164 = vadd.xlane.f32.xlu0 %v163
    %v165 = vpop.xlane.xlu0 %164
    %v166 = vmul.f32 %v148, %v141
    %v167 = vsel %vm48, %v166, 0.0
    %168 = vadd.xlane.f32.xlu0 %v167
    %v169 = vpop.xlane.xlu0 %168
    %v170 = vlog2.pop %v161
    %v171 = vmul.f32 %v170, 0.6931472
    %v172 = vmax.f32 %v171, -100.0
    %v173 = vsub.f32 %v165, %v172
    %v174 = vmul.f32 %v169, %v173
    %v175 = vadd.f32 %v157, %v174
    %v176 = vld [vmem:[%s7] sm:$0x1f]
    %177 = vset.pattern.permute.xlu0 0
    %178 = vperm.xlu0 %177, %v176
    %v179 = vpop.permute.xlu0 %178
    %vm180 = vcmp.eq.s32.totalorder %v113, %v179
    %v181 = vsel %vm180, 1, 0
    %v182 = vcvt.s32.f32 %v181
    %v183 = vsub.f32 1.0, %v140
    %v184 = vlog2.pop %v183
    %v185 = vmul.f32 %v184, 0.6931472
    %v186 = vmax.f32 %v185, -100.0
    %v187 = vsub.f32 0.0, %v186
    %v188 = vmul.f32 %v141, %v187
    %v189 = vsel %vm48, %v188, 0.0
    %190 = vadd.xlane.f32.xlu0 %v189
    %v191 = vpop.xlane.xlu0 %190
    %v192 = vmul.f32 %v182, %v140
    %v193 = vsel %vm48, %v192, 0.0
    %194 = vadd.xlane.f32.xlu0 %v193
    %v195 = vpop.xlane.xlu0 %194
    %v196 = vmul.f32 %v182, %v186
    %v197 = vsel %vm48, %v196, 0.0
    %198 = vadd.xlane.f32.xlu0 %v197
    %v199 = vpop.xlane.xlu0 %198
    %v200 = vmul.f32 %v182, %v141
    %v201 = vsel %vm48, %v200, 0.0
    %202 = vadd.xlane.f32.xlu0 %v201
    %v203 = vpop.xlane.xlu0 %202
    %v204 = vlog2.pop %v195
    %v205 = vmul.f32 %v204, 0.6931472
    %v206 = vmax.f32 %v205, -100.0
    %v207 = vsub.f32 %v199, %v206
    %v208 = vmul.f32 %v203, %v207
    %v209 = vadd.f32 %v191, %v208
    %v210 = vadd.f32 %v175, %v209
    %vm211 = vcmask 1044480
    %v212 = vsel %vm211, %v210, 0.0
    %v213 = vrot.slane %v212, 4
    %v214 = vadd.f32 %v212, %v213
    %v215 = vrot.slane %v214, 2
    %v216 = vadd.f32 %v214, %v215
    %v217 = vrot.slane %v216, 1
    %v218 = vadd.f32 %v216, %v217
    %v219 = vmul.f32 %v218, 0.2
    %220 = vst.msk [vmem:[#allocation8] sm:$0x1] %vm95, %v219
    // Predicated region
    $region38: #{tpu_custom_call.1} parent=1 // pred_check
      _
    $region39: #{tpu_custom_call.1} parent=1 // pred_check_branch
      %222 = sbr.rel (0) target = $region41
    $region40: #{tpu_custom_call.1} parent=1 // pred_region
      %s224 = ssub.s32 16, 16
      %225 = vsyncadd [#allocation4], %s224
      %s227 = sshll.u32 [#allocation5], 4
      %s228 = int_to_ptr.vmem [resolvable:$true] %s227
      %230 = dma.vmem_to_hbm [thread:$0]  %s228, 16, %s8, [#allocation4]
    $region41: #{tpu_custom_call.1} parent=1 // pred_fallthru
      _
    // Predicated region
    $region42: #{tpu_custom_call.1} parent=1 // pred_check
      _
    $region43: #{tpu_custom_call.1} parent=1 // pred_check_branch
      %232 = sbr.rel (0) target = $region45
    $region44: #{tpu_custom_call.1} parent=1 // pred_region
      %s234 = ssub.s32 16, 16
      %235 = vsyncadd [#allocation7], %s234
      %s237 = sshll.u32 [#allocation6], 4
      %s238 = int_to_ptr.vmem [resolvable:$true] %s237
      %240 = dma.vmem_to_hbm [thread:$0]  %s238, 16, %s9, [#allocation7]
    $region45: #{tpu_custom_call.1} parent=1 // pred_fallthru
      _
    // Predicated region
    $region46: #{tpu_custom_call.1} parent=1 // pred_check
      _
    $region47: #{tpu_custom_call.1} parent=1 // pred_check_branch
      %242 = sbr.rel (0) target = $region49
    $region48: #{tpu_custom_call.1} parent=1 // pred_region
      %s244 = ssub.s32 16, 16
      %245 = vsyncadd [#allocation7], %s244
      %s247 = sshll.u32 [#allocation8], 4
      %s248 = int_to_ptr.vmem [resolvable:$true] %s247
      %250 = dma.vmem_to_hbm [thread:$0]  %s248, 16, %s10, [#allocation7]
    $region49: #{tpu_custom_call.1} parent=1 // pred_fallthru
      _
    // Predicated region
    $region50: #{tpu_custom_call.1} parent=1 // pred_check
      _
    $region51: #{tpu_custom_call.1} parent=1 // pred_check_branch
      %252 = sbr.rel (0) target = $region53
    $region52: #{tpu_custom_call.1} parent=1 // pred_region
      %253 = dma.done [#allocation4], 16
    $region53: #{tpu_custom_call.1} parent=1 // pred_fallthru
      _
    // Predicated region
    $region54: #{tpu_custom_call.1} parent=1 // pred_check
      _
    $region55: #{tpu_custom_call.1} parent=1 // pred_check_branch
      %255 = sbr.rel (0) target = $region57
    $region56: #{tpu_custom_call.1} parent=1 // pred_region
      %256 = dma.done [#allocation7], 16
    $region57: #{tpu_custom_call.1} parent=1 // pred_fallthru
      _
    // Predicated region
    $region58: #{tpu_custom_call.1} parent=1 // pred_check
      _
    $region59: #{tpu_custom_call.1} parent=1 // pred_check_branch
      %258 = sbr.rel (0) target = $region61
    $region60: #{tpu_custom_call.1} parent=1 // pred_region
      %259 = dma.done [#allocation7], 16
    $region61: #{tpu_custom_call.1} parent=1 // pred_fallthru
      _
    %260 = vsyncpa [#allocation3], 1
    %261 = vsyncpa [#allocation4], 1
    %262 = vsyncpa [#allocation7], 1

</llo_original>
